<compile_context>
chip_gen: v7x
topology: tpu7x:2x2x1
jax: 0.10.0
libtpu: 0.0.40
codegen_flags: <defaults>
</compile_context>

<pallas_src>
import math
from functools import partial

import jax
import jax.numpy as jnp
from jax.experimental import pallas as pl
from jax.experimental.pallas import tpu as pltpu

_SQRT_2_OVER_PI = math.sqrt(2.0 / math.pi)
_GELU_COEF = 0.044715

_MIN_LANES = 128                                   # minimum lane-dense last dim
_LANE_CHOICES = (8192, 4096, 2048, 1024, 512, 256, 128)   # widest divisor wins
_MIN_PIPELINE_BYTES = 1 * 1024 * 1024              # below this, one block is fine


def _chip_generation() -> int:
    """Best-effort TPU generation detection (wrapper-side, trace-time only)."""
    try:
        kind = jax.devices()[0].device_kind.lower()
    except Exception:
        return 0
    for gen in (7, 6, 5, 4):
        if f"v{gen}" in kind or f"tpu{gen}" in kind:
            return gen
    return 0


_GEN = _chip_generation()

if _GEN in (4, 5, 6):                 # 128 MiB VMEM parts
    _TARGET_BLOCK_BYTES = 8 * 1024 * 1024
    _VMEM_LIMIT_BYTES = 64 * 1024 * 1024
else:                                 # v7x (64 MiB/TC) and unknown chips
    _TARGET_BLOCK_BYTES = 4 * 1024 * 1024
    _VMEM_LIMIT_BYTES = 32 * 1024 * 1024

# Minimum number of grid steps for slabs big enough to benefit from pipelining:
# 2 steps per TensorCore; v7x has 2 TCs sharing the "parallel" axis.
_MIN_GRID = 4 if _GEN == 7 else 2

# bf16 VPU/EUP exists on v6e/v7x only; v5e (and unknown) must compute in f32.
_BF16_COMPUTE_OK = _GEN >= 6


def _gelu_kernel(x_ref, o_ref, *, compute_dtype):
    # DMA stays in the native input dtype; arithmetic runs in `compute_dtype`
    # (bf16 on v6e/v7x for bf16 inputs, f32 otherwise).
    x = x_ref[...].astype(compute_dtype)
    x2 = x * x
    inner = (_SQRT_2_OVER_PI * x) * (1.0 + _GELU_COEF * x2)      # folded polynomial
    o_ref[...] = (0.5 * x * (1.0 + jnp.tanh(inner))).astype(o_ref.dtype)


def _choose_block_rows(rows, cols, io_itemsize, compute_itemsize):
    """Pick a row tile for a (rows, cols) slab: multiple of 8 (or the full extent)."""
    bytes_per_row = cols * max(io_itemsize, compute_itemsize)
    row_tile = max(8, (_TARGET_BLOCK_BYTES // max(bytes_per_row, 1)) // 8 * 8)

    # Never run a >1 MiB slab as a single un-pipelined block: guarantee at least
    # _MIN_GRID grid steps so DMA overlaps compute and v7x's 2nd TC is not idle.
    slab_bytes = rows * cols * io_itemsize
    if slab_bytes > _MIN_PIPELINE_BYTES and rows >= 8 * _MIN_GRID:
        cap = max(8, (rows // _MIN_GRID) // 8 * 8)
        row_tile = min(row_tile, cap)

    if rows <= row_tile:
        return rows                    # single full-extent block (small slabs only)

    # v7x: prefer an even grid length so both TensorCores finish together.
    if _MIN_GRID >= 4:
        nblk = pl.cdiv(rows, row_tile)
        if nblk % 2 == 1 and nblk >= 3:
            cand = max(8, ((pl.cdiv(rows, nblk + 1) + 7) // 8) * 8)
            if pl.cdiv(rows, cand) % 2 == 0:
                row_tile = cand
    return row_tile


def _run_gelu_2d(x2d: jax.Array, compute_dtype) -> jax.Array:
    """Run the GELU kernel over a (rows, cols) slab."""
    rows, cols = x2d.shape
    io_itemsize = jnp.dtype(x2d.dtype).itemsize
    row_tile = _choose_block_rows(rows, cols, io_itemsize,
                                  jnp.dtype(compute_dtype).itemsize)

    block = (row_tile, cols)
    grid = (pl.cdiv(rows, row_tile),)   # ragged final block is masked by Pallas

    n = rows * cols
    cost = pl.CostEstimate(
        flops=8 * n,
        transcendentals=n,
        bytes_accessed=2 * n * io_itemsize,
    )

    return pl.pallas_call(
        partial(_gelu_kernel, compute_dtype=compute_dtype),
        out_shape=jax.ShapeDtypeStruct((rows, cols), x2d.dtype),
        grid_spec=pltpu.PrefetchScalarGridSpec(
            num_scalar_prefetch=0,
            grid=grid,
            in_specs=[pl.BlockSpec(block, lambda i: (i, 0))],
            out_specs=pl.BlockSpec(block, lambda i: (i, 0)),
        ),
        compiler_params=pltpu.CompilerParams(
            dimension_semantics=("parallel",),   # shards rows across TCs on v7x
            vmem_limit_bytes=_VMEM_LIMIT_BYTES,
        ),
        cost_estimate=cost,
    )(x2d)


def gelu_pallas(x: jax.Array) -> jax.Array:
    """Tanh-approx GELU, elementwise, any float shape/dtype."""
    orig_shape = x.shape
    n = x.size
    if n == 0:
        return x

    if x.dtype == jnp.bfloat16 and _BF16_COMPUTE_OK:
        compute_dtype = jnp.bfloat16    # v6e/v7x: stay bf16, stay on the HBM roofline
    else:
        compute_dtype = jnp.float32     # v5e / f32 inputs / unknown chips

    if n % _MIN_LANES == 0:
        # Fast path: reshape to the widest lane-dense slab (no pad, no slice).
        cols = next(c for c in _LANE_CHOICES if n % c == 0)
        out2d = _run_gelu_2d(x.reshape(n // cols, cols), compute_dtype)
        return out2d.reshape(orig_shape)

    # Ragged total size: use the natural (leading-collapsed, last-dim) 2D view so
    # there is no pad -> kernel -> slice HBM round trip.  The last block dim equals
    # the full array dim, which satisfies the (8, 128) BlockSpec rule.
    last = orig_shape[-1] if orig_shape else 1
    lead = n // last
    io_itemsize = jnp.dtype(x.dtype).itemsize
    if last * max(io_itemsize, 4) <= _TARGET_BLOCK_BYTES:
        out2d = _run_gelu_2d(x.reshape(lead, last), compute_dtype)
        return out2d.reshape(orig_shape)

    # Rare corner case: a single ragged row too wide for one block (can't split a
    # non-128-aligned lane dim) -> pad to 8x128 granularity and slice afterwards.
    cols = _MIN_LANES
    chunk = 8 * cols
    total = pl.cdiv(n, chunk) * chunk
    x_flat = jnp.pad(jnp.ravel(x), (0, total - n))
    out2d = _run_gelu_2d(x_flat.reshape(total // cols, cols), compute_dtype)
    return out2d.reshape(-1)[:n].reshape(orig_shape)


def _gelu_ref(x):
    xf = x.astype(jnp.float32)
    out = 0.5 * xf * (1.0 + jnp.tanh(_SQRT_2_OVER_PI * (xf + _GELU_COEF * xf ** 3)))
    return out.astype(x.dtype)


if __name__ == "__main__":
    key = jax.random.PRNGKey(0)
    k1, k2, k3, k4 = jax.random.split(key, 4)

    # Transformer-style activation tensor (batch=2, seq=8, hidden=32) — fast path.
    x0 = jax.random.normal(k1, (2, 8, 32), dtype=jnp.float32)
    y0 = gelu_pallas(x0)
    jax.block_until_ready(y0)
    assert y0.shape == x0.shape and y0.dtype == x0.dtype
    assert jnp.allclose(y0, _gelu_ref(x0), atol=1e-5, rtol=1e-5)

    # Ragged shape — exercises the no-pad natural 2D-view fallback path.
    x1 = jax.random.normal(k2, (3, 7, 5), dtype=jnp.float32)
    y1 = gelu_pallas(x1)
    jax.block_until_ready(y1)
    assert jnp.allclose(y1, _gelu_ref(x1), atol=1e-5, rtol=1e-5)

    # bf16 input — bf16 compute on v6e/v7x, f32 compute on v5e/unknown.
    x2 = jax.random.normal(k3, (2, 8, 128), dtype=jnp.bfloat16)
    y2 = gelu_pallas(x2)
    jax.block_until_ready(y2)
    assert y2.dtype == jnp.bfloat16
    assert jnp.allclose(y2.astype(jnp.float32), _gelu_ref(x2).astype(jnp.float32),
                        atol=2e-2, rtol=2e-2)

    # Moderate 2 MiB tensor — exercises the multi-block pipelined path (grid >= 2).
    x3 = jax.random.normal(k4, (4, 128, 1024), dtype=jnp.float32)
    y3 = gelu_pallas(x3)
    jax.block_until_ready(y3)
    assert jnp.allclose(y3, _gelu_ref(x3), atol=1e-5, rtol=1e-5)

    print("KERNEL_OK")
</pallas_src>

<mosaic_0001>
module attributes {stable_mosaic.version = 11 : i64} {
  func.func @_gelu_kernel(%arg0: i32, %arg1: memref<1x512xf32, #tpu.memory_space<vmem>>, %arg2: memref<1x512xf32, #tpu.memory_space<vmem>>) attributes {dimension_semantics = [#tpu.dimension_semantics<parallel>], iteration_bounds = array<i64: 1>, scalar_prefetch = 0 : i64, scratch_operands = 0 : i64, tpu.core_type = #tpu.core_type<tc>, window_params = [{transform_indices = @transform_0, window_bounds = array<i64: 1, 512>}, {transform_indices = @transform_1, window_bounds = array<i64: 1, 512>}]} {
    %c0 = arith.constant 0 : index
    %c0_0 = arith.constant 0 : index
    %0 = vector.load %arg1[%c0, %c0_0] : memref<1x512xf32, #tpu.memory_space<vmem>>, vector<1x512xf32>
    %1 = arith.mulf %0, %0 : vector<1x512xf32>
    %cst = arith.constant 0.797884583 : f32
    %2 = vector.broadcast %cst : f32 to vector<1x512xf32>
    %3 = arith.mulf %2, %0 : vector<1x512xf32>
    %cst_1 = arith.constant 4.471500e-02 : f32
    %4 = vector.broadcast %cst_1 : f32 to vector<1x512xf32>
    %5 = arith.mulf %4, %1 : vector<1x512xf32>
    %cst_2 = arith.constant 1.000000e+00 : f32
    %6 = vector.broadcast %cst_2 : f32 to vector<1x512xf32>
    %7 = arith.addf %6, %5 : vector<1x512xf32>
    %8 = arith.mulf %3, %7 : vector<1x512xf32>
    %cst_3 = arith.constant 5.000000e-01 : f32
    %9 = vector.broadcast %cst_3 : f32 to vector<1x512xf32>
    %10 = arith.mulf %9, %0 : vector<1x512xf32>
    %11 = math.tanh %8 : vector<1x512xf32>
    %cst_4 = arith.constant 1.000000e+00 : f32
    %12 = vector.broadcast %cst_4 : f32 to vector<1x512xf32>
    %13 = arith.addf %12, %11 : vector<1x512xf32>
    %14 = arith.mulf %10, %13 : vector<1x512xf32>
    %c0_5 = arith.constant 0 : index
    %c0_6 = arith.constant 0 : index
    %15 = vector.load %arg2[%c0_5, %c0_6] : memref<1x512xf32, #tpu.memory_space<vmem>>, vector<1x512xf32>
    tpu.vector_store %arg2[%c0_5, %c0_6], %14 {strides = array<i32>} : memref<1x512xf32, #tpu.memory_space<vmem>>, vector<1x512xf32>,
    return
  }
  func.func @transform_0(%arg0: i32) -> (i32, i32) {
    %c0_i32 = arith.constant 0 : i32
    %c0_i32_0 = arith.constant 0 : i32
    return %arg0, %c0_i32 : i32, i32
  }
  func.func @transform_1(%arg0: i32) -> (i32, i32) {
    %c0_i32 = arith.constant 0 : i32
    %c0_i32_0 = arith.constant 0 : i32
    return %arg0, %c0_i32 : i32, i32
  }
}

</mosaic_0001>

<llo_original>
// kernel: tpu_custom_call.1
$region0: #{tpu_custom_call.1}
  #allocation0 [shape = 'u32[]', space=smem, size = 0x4, offset = 0x4, fixed_abs, tag = 'smem constant byte address 0x4 - core index']
  #allocation1 [shape = 'u32[144,128]{1,0:T(1,128)}', space=vmem, size = 0x12000, scoped, tag = 'internal scratch']
  %s0 = inlined_call_operand.hbm [shape: f32[1,512], index: 0, kind: input, shape index: {}]
  %s1 = inlined_call_operand.hbm [shape: f32[1,512], index: 1, kind: output, shape index: {}]
  %s2 = sld [smem:[#allocation0]]
  $region18: #{tpu_custom_call.1} parent=0
    _
  %s4 = ssub.s32 1, %s2
  %s5 = scalar_select 0, %s4, %s2
  $region1: #{tpu_custom_call.1} parent=0
    #allocation2 [shape = 'u8[2048]{0}', space=vmem, size = 0x800, scoped, tag = 'input window, operand 0, single buffered']
    #allocation3 [shape = 's32[1]{0}', space=sflag, size = 0x4, scoped, tag = 'scoped memory for tpu_custom_call.1']
    #allocation4 [shape = 's32[1]{0}', space=sflag, size = 0x4, scoped, tag = 'scoped memory for tpu_custom_call.1']
    #allocation5 [shape = 'u8[2048]{0}', space=vmem, size = 0x800, scoped, tag = 'output window, operand 0, single buffered']
    %6 = vsyncpa [#allocation3], 0
    %7 = vsyncpa [#allocation4], 0
    // Predicated region
    $region2: #{tpu_custom_call.1} parent=1 // pred_check
      _
    $region3: #{tpu_custom_call.1} parent=1 // pred_check_branch
      %9 = sbr.rel (0) target = $region5
    $region4: #{tpu_custom_call.1} parent=1 // pred_region
      %s11 = ssub.s32 64, 64
      %12 = vsyncadd [#allocation3], %s11
      %s14 = sshll.u32 [#allocation2], 4
      %s15 = int_to_ptr.vmem [resolvable:$true] %s14
      %17 = dma.hbm_to_vmem [thread:$0]  %s0, 64, %s15, [#allocation3]
    $region5: #{tpu_custom_call.1} parent=1 // pred_fallthru
      _
    // Predicated region
    $region6: #{tpu_custom_call.1} parent=1 // pred_check
      _
    $region7: #{tpu_custom_call.1} parent=1 // pred_check_branch
      %19 = sbr.rel (0) target = $region9
    $region8: #{tpu_custom_call.1} parent=1 // pred_region
      %20 = dma.done [#allocation3], 64
    $region9: #{tpu_custom_call.1} parent=1 // pred_fallthru
      _
    %v21 = vld [vmem:[#allocation2] sm:$0xf]
    %v22 = vmul.f32 %v21, %v21
    %v23 = vmul.f32 %v21, 0.7978846
    %v24 = vmul.f32 %v22, 0.044715
    %v25 = vadd.f32 %v24, 1.0
    %v26 = vmul.f32 %v23, %v25
    %v27 = vmul.f32 %v21, 0.5
    %v28 = vtanh.pop %v26
    %v29 = vadd.f32 %v28, 1.0
    %v30 = vmul.f32 %v27, %v29
    %v31 = vlaneseq
    %vm32 = vcmp.ge.s32.totalorder %v31, 0
    %vm33 = vcmp.lt.s32.totalorder %v31, 512
    %vm34 = vmand %vm32, %vm33
    %35 = vst.msk [vmem:[#allocation5] sm:$0xf] %vm34, %v30
    // Predicated region
    $region10: #{tpu_custom_call.1} parent=1 // pred_check
      _
    $region11: #{tpu_custom_call.1} parent=1 // pred_check_branch
      %37 = sbr.rel (0) target = $region13
    $region12: #{tpu_custom_call.1} parent=1 // pred_region
      %s39 = ssub.s32 64, 64
      %40 = vsyncadd [#allocation4], %s39
      %s42 = sshll.u32 [#allocation5], 4
      %s43 = int_to_ptr.vmem [resolvable:$true] %s42
      %45 = dma.vmem_to_hbm [thread:$0]  %s43, 64, %s1, [#allocation4]
    $region13: #{tpu_custom_call.1} parent=1 // pred_fallthru
      _
    // Predicated region
    $region14: #{tpu_custom_call.1} parent=1 // pred_check
      _
    $region15: #{tpu_custom_call.1} parent=1 // pred_check_branch
      %47 = sbr.rel (0) target = $region17
    $region16: #{tpu_custom_call.1} parent=1 // pred_region
      %48 = dma.done [#allocation4], 64
    $region17: #{tpu_custom_call.1} parent=1 // pred_fallthru
      _
    %49 = vsyncpa [#allocation3], 1
    %50 = vsyncpa [#allocation4], 1

</llo_original>
